<compile_context>
chip_gen: v7x
topology: tpu7x:2x2x1
jax: 0.10.0
libtpu: 0.0.40
codegen_flags: <defaults>
</compile_context>

<pallas_src>
import functools

import jax
import jax.numpy as jnp
from jax import lax
from jax.experimental import pallas as pl
from jax.experimental.pallas import tpu as pltpu


# ----------------------------------------------------------------------------
# Fused Pallas kernel: all CLIP pair losses + all label-smoothed CE heads
# ----------------------------------------------------------------------------
def _siamese_loss_kernel(*refs, n_pairs, n_heads, margin, epsilon, cls_weight):
    """Fused loss head.

    refs layout (inputs then outputs):
      vis_0..vis_{P-1}   : [B, D] VMEM (native dtype)
      lang_0..lang_{P-1} : [B, D] VMEM (native dtype)
      cls_0..cls_{H-1}   : [B, C] VMEM (native dtype)
      labels             : [B, 1] VMEM int32 (sublane-major id_car)
      scale              : [1, 1] SMEM f32  (logit_scale.mean().exp())
      acc_sim (out)      : [B, B] VMEM f32  (last pair's scaled similarity)
      losses  (out)      : [1, 128] VMEM f32, lane0=con_clip_loss, lane1=cls_loss
    """
    vis_refs = refs[:n_pairs]
    lang_refs = refs[n_pairs:2 * n_pairs]
    cls_refs = refs[2 * n_pairs:2 * n_pairs + n_heads]
    labels_ref = refs[2 * n_pairs + n_heads]
    scale_ref = refs[2 * n_pairs + n_heads + 1]
    acc_sim_ref = refs[2 * n_pairs + n_heads + 2]
    losses_ref = refs[2 * n_pairs + n_heads + 3]

    b = vis_refs[0].shape[0]
    c = cls_refs[0].shape[1]
    scale = scale_ref[0, 0]

    # Diagonal mask built once, reused for every pair (both CE directions).
    diag = (lax.broadcasted_iota(jnp.int32, (b, b), 0)
            == lax.broadcasted_iota(jnp.int32, (b, b), 1))
    diag_f = diag.astype(jnp.float32) if margin != 0.0 else None

    contract_lanes = (((1,), (1,)), ((), ()))  # contract last dim of BOTH operands

    # ---- CLIP contrastive loss over all pairs (static unroll) ----------------
    con_clip_loss = jnp.float32(0.0)
    for p in range(n_pairs):
        # Native-dtype operands straight to the MXU; f32 accumulation.
        sim = scale * lax.dot_general(vis_refs[p][...], lang_refs[p][...],
                                      contract_lanes,
                                      preferred_element_type=jnp.float32)   # [B, B]
        if p == n_pairs - 1:
            # Reference loop overwrites acc_sim each iteration -> last pair wins.
            acc_sim_ref[...] = sim
        if margin != 0.0:
            logits = sim - margin * diag_f
        else:
            logits = sim
        masked_diag = jnp.where(diag, logits, 0.0)
        pos_row = jnp.sum(masked_diag, axis=1, keepdims=True)               # [B, 1]
        pos_col = jnp.sum(masked_diag, axis=0, keepdims=True)               # [1, B]
        # i2t: softmax over lanes (columns) of the tile.
        m_r = jnp.max(logits, axis=1, keepdims=True)
        lse_r = m_r + jnp.log(jnp.sum(jnp.exp(logits - m_r), axis=1, keepdims=True))
        # t2i == i2t of logits^T: softmax over sublanes (rows) of the SAME tile,
        # so no second MXU product and no materialized transpose (XLU reductions).
        m_c = jnp.max(logits, axis=0, keepdims=True)
        lse_c = m_c + jnp.log(jnp.sum(jnp.exp(logits - m_c), axis=0, keepdims=True))
        loss_i2t = jnp.sum(lse_r - pos_row) * (1.0 / b)
        loss_t2i = jnp.sum(lse_c - pos_col) * (1.0 / b)
        con_clip_loss = con_clip_loss + 0.5 * (loss_i2t + loss_t2i)

    # ---- Label-smoothed cross-entropy over the id heads ----------------------
    # q = (1-eps)*onehot + eps/C  ->  loss = (1-eps)*(lse - logit_y)
    #                                        + eps/C * (C*lse - sum_c logit_c)
    labels_col = labels_ref[...]                                             # [B, 1] int32
    target_mask = lax.broadcasted_iota(jnp.int32, (b, c), 1) == labels_col   # [B, C]

    cls_loss = jnp.float32(0.0)
    for h in range(n_heads):
        logits = cls_refs[h][...].astype(jnp.float32)   # exp/log path in f32 (v5e-safe VPU/EUP)
        m = jnp.max(logits, axis=1, keepdims=True)
        lse = m + jnp.log(jnp.sum(jnp.exp(logits - m), axis=1, keepdims=True))
        row_sum = jnp.sum(logits, axis=1, keepdims=True)
        pos = jnp.sum(jnp.where(target_mask, logits, 0.0), axis=1, keepdims=True)
        per_row = (1.0 - epsilon) * (lse - pos) + (epsilon / c) * (c * lse - row_sum)
        cls_loss = cls_loss + cls_weight * (jnp.sum(per_row) * (1.0 / b))

    # Lane-dense scalar output: lane 0 = con_clip_loss, lane 1 = cls_loss.
    lane = lax.broadcasted_iota(jnp.int32, (1, 128), 1)
    losses_ref[...] = (jnp.where(lane == 0, con_clip_loss, 0.0)
                       + jnp.where(lane == 1, cls_loss, 0.0))


def siamese_losses_pallas(vis_list, lang_list, cls_list, id_car, scale,
                          *, margin=0.0, epsilon=0.1, cls_weight=0.5):
    """Single fused pallas_call for all collator losses (no wrapper stacking).

    Returns (con_clip_loss, cls_loss, acc_sim).
    """
    n_pairs = len(vis_list)
    n_heads = len(cls_list)
    b, d = vis_list[0].shape
    c = cls_list[0].shape[1]
    labels_col = id_car.astype(jnp.int32).reshape(b, 1)        # sublane-major labels
    scale2d = jnp.reshape(scale, (1, 1)).astype(jnp.float32)   # SMEM scalar

    # TODO(synk): production shapes — tile the class axis as the LAST grid axis
    # with online logsumexp (flash-CE, pl.when init/finalize), add a leading
    # "parallel" grid axis so v7x's second TensorCore is used, and budget block
    # sizes per generation (64 MiB physical / 32 MiB scoped VMEM on v7x,
    # 16 MiB scoped default on v5e) via pltpu.CompilerParams(vmem_limit_bytes=...).
    # A single grid-less block is optimal at these test shapes.
    # TODO(synk): wrap in custom_vjp reusing sim/logsumexp residuals for training.
    in_specs = (
        [pl.BlockSpec((b, d), lambda: (0, 0)) for _ in range(n_pairs)]       # vis_p
        + [pl.BlockSpec((b, d), lambda: (0, 0)) for _ in range(n_pairs)]     # lang_p
        + [pl.BlockSpec((b, c), lambda: (0, 0)) for _ in range(n_heads)]     # cls_h
        + [pl.BlockSpec((b, 1), lambda: (0, 0)),                             # labels
           pl.BlockSpec(memory_space=pltpu.MemorySpace.SMEM)]                # scale
    )

    acc_sim, losses = pl.pallas_call(
        functools.partial(_siamese_loss_kernel, n_pairs=n_pairs, n_heads=n_heads,
                          margin=float(margin), epsilon=float(epsilon),
                          cls_weight=float(cls_weight)),
        out_shape=(jax.ShapeDtypeStruct((b, b), jnp.float32),
                   jax.ShapeDtypeStruct((1, 128), jnp.float32)),
        in_specs=in_specs,
        out_specs=(pl.BlockSpec((b, b), lambda: (0, 0)),
                   pl.BlockSpec((1, 128), lambda: (0, 0))),
    )(*vis_list, *lang_list, *cls_list, labels_col, scale2d)
    return losses[0, 0], losses[0, 1], acc_sim


# ----------------------------------------------------------------------------
# Synthetic encoder (glue — the real encoder is an external nn.Module argument)
# ----------------------------------------------------------------------------
def _l2norm(x):
    return x / jnp.sqrt(jnp.sum(x * x, axis=-1, keepdims=True) + 1e-12)


def init_params(key, feat_dim, text_dim, embed_dim, num_classes):
    ks = jax.random.split(key, 5)
    sd = 0.02
    return {
        "w_vis1": sd * jax.random.normal(ks[0], (feat_dim, embed_dim), jnp.float32),
        "w_vis2": sd * jax.random.normal(ks[1], (feat_dim, embed_dim), jnp.float32),
        "w_lang1": sd * jax.random.normal(ks[2], (text_dim, embed_dim), jnp.float32),
        "w_lang2": sd * jax.random.normal(ks[3], (text_dim, embed_dim), jnp.float32),
        "w_cls": sd * jax.random.normal(ks[4], (embed_dim, num_classes), jnp.float32),
        "logit_scale": jnp.full((1,), jnp.log(1.0 / 0.07), jnp.float32),
    }


def synthetic_encoder(params, images, text_feats):
    # TODO(synk): the encoder is an external module in the reference; at these
    # toy shapes it could also be folded into the same pallas_call (5 tiny
    # matmuls + rsqrt), but it is kept as plain JAX inside the single jit so
    # XLA fuses the surrounding glue.
    b = images.shape[0]
    x = images.reshape(b, -1)                                # NCHW -> [B, C*H*W]
    vis1 = _l2norm(x @ params["w_vis1"])
    vis2 = _l2norm(x @ params["w_vis2"])
    lang1 = _l2norm(text_feats @ params["w_lang1"])
    lang2 = _l2norm(text_feats @ params["w_lang2"])
    cls_logits = [vis1 @ params["w_cls"], vis2 @ params["w_cls"]]
    return {
        "pairs": [(vis1, lang1), (vis2, lang2)],
        "logit_scale": params["logit_scale"],
        "cls_logits": cls_logits,
    }


# ----------------------------------------------------------------------------
# SiameseCollator.forward equivalent
# ----------------------------------------------------------------------------
CFG = {
    "MODEL_NAME": "dual-stream",     # no 'view', not dual-text-add/cat
    "CLIP_LOSS": True,
    "CLIP_LOSS_MARGIN": 0.0,
    "CLS_WEIGHT": 0.5,
    "CE_EPSILON": 0.1,
    "USE_METRIC_LOSS": False,
}


def siamese_collator_forward(params, id_car, images, text_feats, cfg):
    outputs = synthetic_encoder(params, images, text_feats)
    pairs = outputs["pairs"]
    logit_scale = outputs["logit_scale"]
    cls_logits = outputs["cls_logits"]

    scale = jnp.exp(jnp.mean(logit_scale))

    # MODEL.NAME is not a dual-text-add/cat variant -> loss_pairs = pairs
    loss_pairs = pairs

    if cfg["CLIP_LOSS"]:
        con_clip_loss, cls_loss, acc_sim = siamese_losses_pallas(
            [v for v, _ in loss_pairs], [l for _, l in loss_pairs], cls_logits,
            id_car, scale, margin=cfg["CLIP_LOSS_MARGIN"],
            epsilon=cfg["CE_EPSILON"], cls_weight=cfg["CLS_WEIGHT"])
    else:
        # acc_sim = pairs[-1][0] @ pairs[-1][1].T (unscaled); clip loss unused.
        _, cls_loss, acc_sim = siamese_losses_pallas(
            [pairs[-1][0]], [pairs[-1][1]], cls_logits, id_car,
            jnp.float32(1.0), margin=0.0,
            epsilon=cfg["CE_EPSILON"], cls_weight=cfg["CLS_WEIGHT"])
        con_clip_loss = jnp.float32(0.0)

    # TODO(synk): nlp_view_loss / metric_loss rely on external view_loss /
    # build_metric_loss builders; disabled by this config (no 'view' model,
    # USE_METRIC_LOSS=False), matching the reference control flow.
    nlp_view_loss = jnp.float32(0.0)
    metric_loss = jnp.float32(0.0)

    loss = con_clip_loss + cls_loss + metric_loss + nlp_view_loss
    aux = {
        "clip_losses": con_clip_loss,
        "cls_losses": cls_loss,
        "metric_losses": metric_loss,
        "nlp_view_losses": nlp_view_loss,
    }
    return loss, acc_sim, aux


# ----------------------------------------------------------------------------
# Main
# ----------------------------------------------------------------------------
if __name__ == "__main__":
    B, C, H, W = 8, 4, 16, 16
    TEXT_DIM = 32
    EMBED_DIM = 32
    NUM_CLASSES = 16

    key = jax.random.PRNGKey(0)
    k_img, k_txt, k_id, k_par = jax.random.split(key, 4)
    images = jax.random.normal(k_img, (B, C, H, W), jnp.float32)       # NCHW
    text_feats = jax.random.normal(k_txt, (B, TEXT_DIM), jnp.float32)
    id_car = jax.random.randint(k_id, (B,), 0, NUM_CLASSES)
    params = init_params(k_par, C * H * W, TEXT_DIM, EMBED_DIM, NUM_CLASSES)

    fwd = jax.jit(lambda p, ids, im, tx: siamese_collator_forward(p, ids, im, tx, CFG))
    loss, acc_sim, aux = fwd(params, id_car, images, text_feats)
    jax.block_until_ready((loss, acc_sim, aux))

    # meter bookkeeping (host-side, mirrors AverageMeter.update)
    meters = {k: {"sum": float(v) * B, "count": B, "avg": float(v)} for k, v in aux.items()}
    assert acc_sim.shape == (B, B)
    assert jnp.isfinite(loss)
    print("KERNEL_OK")
</pallas_src>

<mosaic_0001>
module attributes {stable_mosaic.version = 11 : i64} {
  func.func @_siamese_loss_kernel(%arg0: memref<8x32xf32, #tpu.memory_space<vmem>>, %arg1: memref<8x32xf32, #tpu.memory_space<vmem>>, %arg2: memref<8x32xf32, #tpu.memory_space<vmem>>, %arg3: memref<8x32xf32, #tpu.memory_space<vmem>>, %arg4: memref<8x16xf32, #tpu.memory_space<vmem>>, %arg5: memref<8x16xf32, #tpu.memory_space<vmem>>, %arg6: memref<8x1xi32, #tpu.memory_space<vmem>>, %arg7: memref<1x1xf32, #tpu.memory_space<smem>>, %arg8: memref<8x8xf32, #tpu.memory_space<vmem>>, %arg9: memref<1x128xf32, #tpu.memory_space<vmem>>) attributes {dimension_semantics = [], scalar_prefetch = 0 : i64, scratch_operands = 0 : i64, tpu.core_type = #tpu.core_type<tc>} {
    %c0 = arith.constant 0 : index
    %c0_0 = arith.constant 0 : index
    %0 = memref.load %arg7[%c0, %c0_0] : memref<1x1xf32, #tpu.memory_space<smem>>
    %1 = tpu.iota {dimensions = array<i32: 0>} : vector<8x8xi32>
    %2 = tpu.iota {dimensions = array<i32: 1>} : vector<8x8xi32>
    %3 = arith.cmpi eq, %1, %2 : vector<8x8xi32>
    %c0_1 = arith.constant 0 : index
    %c0_2 = arith.constant 0 : index
    %4 = vector.load %arg0[%c0_1, %c0_2] : memref<8x32xf32, #tpu.memory_space<vmem>>, vector<8x32xf32>
    %c0_3 = arith.constant 0 : index
    %c0_4 = arith.constant 0 : index
    %5 = vector.load %arg2[%c0_3, %c0_4] : memref<8x32xf32, #tpu.memory_space<vmem>>, vector<8x32xf32>
    %cst = arith.constant dense<0.000000e+00> : vector<8x8xf32>
    %6 = tpu.matmul %4, %5, %cst {dimension_numbers = #tpu.dot_dimension_numbers<[1], [1], [0], [0], [0, 0, 1, 0], [], []>} : vector<8x32xf32>, vector<8x32xf32>, vector<8x8xf32> -> vector<8x8xf32>
    %7 = vector.broadcast %0 : f32 to vector<8x8xf32>
    %8 = arith.mulf %7, %6 : vector<8x8xf32>
    %cst_5 = arith.constant 0.000000e+00 : f32
    %9 = vector.broadcast %cst_5 : f32 to vector<8x8xf32>
    %10 = arith.select %3, %8, %9 : vector<8x8xi1>, vector<8x8xf32>
    %cst_6 = arith.constant dense<0.000000e+00> : vector<8xf32>
    %11 = vector.multi_reduction <add>, %10, %cst_6 [1] : vector<8x8xf32> to vector<8xf32>
    %12 = vector.shape_cast %11 : vector<8xf32> to vector<8x1xf32>
    %cst_7 = arith.constant dense<0.000000e+00> : vector<8xf32>
    %13 = vector.multi_reduction <add>, %10, %cst_7 [0] : vector<8x8xf32> to vector<8xf32>
    %14 = vector.shape_cast %13 : vector<8xf32> to vector<1x8xf32>
    %cst_8 = arith.constant dense<0xFF800000> : vector<8xf32>
    %15 = vector.multi_reduction <maximumf>, %8, %cst_8 [1] : vector<8x8xf32> to vector<8xf32>
    %16 = vector.shape_cast %15 : vector<8xf32> to vector<8x1xf32>
    %17 = vector.broadcast %16 : vector<8x1xf32> to vector<8x8xf32>
    %18 = arith.subf %8, %17 : vector<8x8xf32>
    %19 = math.exp %18 : vector<8x8xf32>
    %cst_9 = arith.constant dense<0.000000e+00> : vector<8xf32>
    %20 = vector.multi_reduction <add>, %19, %cst_9 [1] : vector<8x8xf32> to vector<8xf32>
    %21 = vector.shape_cast %20 : vector<8xf32> to vector<8x1xf32>
    %22 = math.log %21 : vector<8x1xf32>
    %23 = arith.addf %16, %22 : vector<8x1xf32>
    %cst_10 = arith.constant dense<0xFF800000> : vector<8xf32>
    %24 = vector.multi_reduction <maximumf>, %8, %cst_10 [0] : vector<8x8xf32> to vector<8xf32>
    %25 = vector.shape_cast %24 : vector<8xf32> to vector<1x8xf32>
    %26 = vector.broadcast %25 : vector<1x8xf32> to vector<8x8xf32>
    %27 = arith.subf %8, %26 : vector<8x8xf32>
    %28 = math.exp %27 : vector<8x8xf32>
    %cst_11 = arith.constant dense<0.000000e+00> : vector<8xf32>
    %29 = vector.multi_reduction <add>, %28, %cst_11 [0] : vector<8x8xf32> to vector<8xf32>
    %30 = vector.shape_cast %29 : vector<8xf32> to vector<1x8xf32>
    %31 = math.log %30 : vector<1x8xf32>
    %32 = arith.addf %25, %31 : vector<1x8xf32>
    %33 = arith.subf %23, %12 : vector<8x1xf32>
    %34 = vector.shape_cast %33 : vector<8x1xf32> to vector<1x8x1xf32>
    %cst_12 = arith.constant dense<0.000000e+00> : vector<1xf32>
    %35 = vector.multi_reduction <add>, %34, %cst_12 [1, 2] : vector<1x8x1xf32> to vector<1xf32>
    %36 = vector.shape_cast %35 : vector<1xf32> to vector<1x1x1xf32>
    %37 = vector.extract %36[0, 0, 0] : f32 from vector<1x1x1xf32>
    %cst_13 = arith.constant 1.250000e-01 : f32
    %38 = arith.mulf %37, %cst_13 : f32
    %39 = arith.subf %32, %14 : vector<1x8xf32>
    %40 = vector.shape_cast %39 : vector<1x8xf32> to vector<1x1x8xf32>
    %cst_14 = arith.constant dense<0.000000e+00> : vector<1xf32>
    %41 = vector.multi_reduction <add>, %40, %cst_14 [1, 2] : vector<1x1x8xf32> to vector<1xf32>
    %42 = vector.shape_cast %41 : vector<1xf32> to vector<1x1x1xf32>
    %43 = vector.extract %42[0, 0, 0] : f32 from vector<1x1x1xf32>
    %cst_15 = arith.constant 1.250000e-01 : f32
    %44 = arith.mulf %43, %cst_15 : f32
    %45 = arith.addf %38, %44 : f32
    %cst_16 = arith.constant 5.000000e-01 : f32
    %46 = arith.mulf %cst_16, %45 : f32
    %cst_17 = arith.constant 0.000000e+00 : f32
    %47 = arith.addf %cst_17, %46 : f32
    %c0_18 = arith.constant 0 : index
    %c0_19 = arith.constant 0 : index
    %48 = vector.load %arg1[%c0_18, %c0_19] : memref<8x32xf32, #tpu.memory_space<vmem>>, vector<8x32xf32>
    %c0_20 = arith.constant 0 : index
    %c0_21 = arith.constant 0 : index
    %49 = vector.load %arg3[%c0_20, %c0_21] : memref<8x32xf32, #tpu.memory_space<vmem>>, vector<8x32xf32>
    %cst_22 = arith.constant dense<0.000000e+00> : vector<8x8xf32>
    %50 = tpu.matmul %48, %49, %cst_22 {dimension_numbers = #tpu.dot_dimension_numbers<[1], [1], [0], [0], [0, 0, 1, 0], [], []>} : vector<8x32xf32>, vector<8x32xf32>, vector<8x8xf32> -> vector<8x8xf32>
    %51 = vector.broadcast %0 : f32 to vector<8x8xf32>
    %52 = arith.mulf %51, %50 : vector<8x8xf32>
    %c0_23 = arith.constant 0 : index
    %c0_24 = arith.constant 0 : index
    %53 = vector.load %arg8[%c0_23, %c0_24] : memref<8x8xf32, #tpu.memory_space<vmem>>, vector<8x8xf32>
    tpu.vector_store %arg8[%c0_23, %c0_24], %52 {strides = array<i32>} : memref<8x8xf32, #tpu.memory_space<vmem>>, vector<8x8xf32>,
    %cst_25 = arith.constant 0.000000e+00 : f32
    %54 = vector.broadcast %cst_25 : f32 to vector<8x8xf32>
    %55 = arith.select %3, %52, %54 : vector<8x8xi1>, vector<8x8xf32>
    %cst_26 = arith.constant dense<0.000000e+00> : vector<8xf32>
    %56 = vector.multi_reduction <add>, %55, %cst_26 [1] : vector<8x8xf32> to vector<8xf32>
    %57 = vector.shape_cast %56 : vector<8xf32> to vector<8x1xf32>
    %cst_27 = arith.constant dense<0.000000e+00> : vector<8xf32>
    %58 = vector.multi_reduction <add>, %55, %cst_27 [0] : vector<8x8xf32> to vector<8xf32>
    %59 = vector.shape_cast %58 : vector<8xf32> to vector<1x8xf32>
    %cst_28 = arith.constant dense<0xFF800000> : vector<8xf32>
    %60 = vector.multi_reduction <maximumf>, %52, %cst_28 [1] : vector<8x8xf32> to vector<8xf32>
    %61 = vector.shape_cast %60 : vector<8xf32> to vector<8x1xf32>
    %62 = vector.broadcast %61 : vector<8x1xf32> to vector<8x8xf32>
    %63 = arith.subf %52, %62 : vector<8x8xf32>
    %64 = math.exp %63 : vector<8x8xf32>
    %cst_29 = arith.constant dense<0.000000e+00> : vector<8xf32>
    %65 = vector.multi_reduction <add>, %64, %cst_29 [1] : vector<8x8xf32> to vector<8xf32>
    %66 = vector.shape_cast %65 : vector<8xf32> to vector<8x1xf32>
    %67 = math.log %66 : vector<8x1xf32>
    %68 = arith.addf %61, %67 : vector<8x1xf32>
    %cst_30 = arith.constant dense<0xFF800000> : vector<8xf32>
    %69 = vector.multi_reduction <maximumf>, %52, %cst_30 [0] : vector<8x8xf32> to vector<8xf32>
    %70 = vector.shape_cast %69 : vector<8xf32> to vector<1x8xf32>
    %71 = vector.broadcast %70 : vector<1x8xf32> to vector<8x8xf32>
    %72 = arith.subf %52, %71 : vector<8x8xf32>
    %73 = math.exp %72 : vector<8x8xf32>
    %cst_31 = arith.constant dense<0.000000e+00> : vector<8xf32>
    %74 = vector.multi_reduction <add>, %73, %cst_31 [0] : vector<8x8xf32> to vector<8xf32>
    %75 = vector.shape_cast %74 : vector<8xf32> to vector<1x8xf32>
    %76 = math.log %75 : vector<1x8xf32>
    %77 = arith.addf %70, %76 : vector<1x8xf32>
    %78 = arith.subf %68, %57 : vector<8x1xf32>
    %79 = vector.shape_cast %78 : vector<8x1xf32> to vector<1x8x1xf32>
    %cst_32 = arith.constant dense<0.000000e+00> : vector<1xf32>
    %80 = vector.multi_reduction <add>, %79, %cst_32 [1, 2] : vector<1x8x1xf32> to vector<1xf32>
    %81 = vector.shape_cast %80 : vector<1xf32> to vector<1x1x1xf32>
    %82 = vector.extract %81[0, 0, 0] : f32 from vector<1x1x1xf32>
    %cst_33 = arith.constant 1.250000e-01 : f32
    %83 = arith.mulf %82, %cst_33 : f32
    %84 = arith.subf %77, %59 : vector<1x8xf32>
    %85 = vector.shape_cast %84 : vector<1x8xf32> to vector<1x1x8xf32>
    %cst_34 = arith.constant dense<0.000000e+00> : vector<1xf32>
    %86 = vector.multi_reduction <add>, %85, %cst_34 [1, 2] : vector<1x1x8xf32> to vector<1xf32>
    %87 = vector.shape_cast %86 : vector<1xf32> to vector<1x1x1xf32>
    %88 = vector.extract %87[0, 0, 0] : f32 from vector<1x1x1xf32>
    %cst_35 = arith.constant 1.250000e-01 : f32
    %89 = arith.mulf %88, %cst_35 : f32
    %90 = arith.addf %83, %89 : f32
    %cst_36 = arith.constant 5.000000e-01 : f32
    %91 = arith.mulf %cst_36, %90 : f32
    %92 = arith.addf %47, %91 : f32
    %c0_37 = arith.constant 0 : index
    %c0_38 = arith.constant 0 : index
    %93 = vector.load %arg6[%c0_37, %c0_38] : memref<8x1xi32, #tpu.memory_space<vmem>>, vector<8x1xi32>
    %94 = tpu.iota {dimensions = array<i32: 1>} : vector<8x16xi32>
    %95 = vector.broadcast %93 : vector<8x1xi32> to vector<8x16xi32>
    %96 = arith.cmpi eq, %94, %95 : vector<8x16xi32>
    %c0_39 = arith.constant 0 : index
    %c0_40 = arith.constant 0 : index
    %97 = vector.load %arg4[%c0_39, %c0_40] : memref<8x16xf32, #tpu.memory_space<vmem>>, vector<8x16xf32>
    %cst_41 = arith.constant dense<0xFF800000> : vector<8xf32>
    %98 = vector.multi_reduction <maximumf>, %97, %cst_41 [1] : vector<8x16xf32> to vector<8xf32>
    %99 = vector.shape_cast %98 : vector<8xf32> to vector<8x1xf32>
    %100 = vector.broadcast %99 : vector<8x1xf32> to vector<8x16xf32>
    %101 = arith.subf %97, %100 : vector<8x16xf32>
    %102 = math.exp %101 : vector<8x16xf32>
    %cst_42 = arith.constant dense<0.000000e+00> : vector<8xf32>
    %103 = vector.multi_reduction <add>, %102, %cst_42 [1] : vector<8x16xf32> to vector<8xf32>
    %104 = vector.shape_cast %103 : vector<8xf32> to vector<8x1xf32>
    %105 = math.log %104 : vector<8x1xf32>
    %106 = arith.addf %99, %105 : vector<8x1xf32>
    %cst_43 = arith.constant dense<0.000000e+00> : vector<8xf32>
    %107 = vector.multi_reduction <add>, %97, %cst_43 [1] : vector<8x16xf32> to vector<8xf32>
    %108 = vector.shape_cast %107 : vector<8xf32> to vector<8x1xf32>
    %cst_44 = arith.constant 0.000000e+00 : f32
    %109 = vector.broadcast %cst_44 : f32 to vector<8x16xf32>
    %110 = arith.select %96, %97, %109 : vector<8x16xi1>, vector<8x16xf32>
    %cst_45 = arith.constant dense<0.000000e+00> : vector<8xf32>
    %111 = vector.multi_reduction <add>, %110, %cst_45 [1] : vector<8x16xf32> to vector<8xf32>
    %112 = vector.shape_cast %111 : vector<8xf32> to vector<8x1xf32>
    %113 = arith.subf %106, %112 : vector<8x1xf32>
    %cst_46 = arith.constant 0.899999976 : f32
    %114 = vector.broadcast %cst_46 : f32 to vector<8x1xf32>
    %115 = arith.mulf %114, %113 : vector<8x1xf32>
    %cst_47 = arith.constant 1.600000e+01 : f32
    %116 = vector.broadcast %cst_47 : f32 to vector<8x1xf32>
    %117 = arith.mulf %116, %106 : vector<8x1xf32>
    %118 = arith.subf %117, %108 : vector<8x1xf32>
    %cst_48 = arith.constant 6.250000e-03 : f32
    %119 = vector.broadcast %cst_48 : f32 to vector<8x1xf32>
    %120 = arith.mulf %119, %118 : vector<8x1xf32>
    %121 = arith.addf %115, %120 : vector<8x1xf32>
    %122 = vector.shape_cast %121 : vector<8x1xf32> to vector<1x8x1xf32>
    %cst_49 = arith.constant dense<0.000000e+00> : vector<1xf32>
    %123 = vector.multi_reduction <add>, %122, %cst_49 [1, 2] : vector<1x8x1xf32> to vector<1xf32>
    %124 = vector.shape_cast %123 : vector<1xf32> to vector<1x1x1xf32>
    %125 = vector.extract %124[0, 0, 0] : f32 from vector<1x1x1xf32>
    %cst_50 = arith.constant 1.250000e-01 : f32
    %126 = arith.mulf %125, %cst_50 : f32
    %cst_51 = arith.constant 5.000000e-01 : f32
    %127 = arith.mulf %cst_51, %126 : f32
    %cst_52 = arith.constant 0.000000e+00 : f32
    %128 = arith.addf %cst_52, %127 : f32
    %c0_53 = arith.constant 0 : index
    %c0_54 = arith.constant 0 : index
    %129 = vector.load %arg5[%c0_53, %c0_54] : memref<8x16xf32, #tpu.memory_space<vmem>>, vector<8x16xf32>
    %cst_55 = arith.constant dense<0xFF800000> : vector<8xf32>
    %130 = vector.multi_reduction <maximumf>, %129, %cst_55 [1] : vector<8x16xf32> to vector<8xf32>
    %131 = vector.shape_cast %130 : vector<8xf32> to vector<8x1xf32>
    %132 = vector.broadcast %131 : vector<8x1xf32> to vector<8x16xf32>
    %133 = arith.subf %129, %132 : vector<8x16xf32>
    %134 = math.exp %133 : vector<8x16xf32>
    %cst_56 = arith.constant dense<0.000000e+00> : vector<8xf32>
    %135 = vector.multi_reduction <add>, %134, %cst_56 [1] : vector<8x16xf32> to vector<8xf32>
    %136 = vector.shape_cast %135 : vector<8xf32> to vector<8x1xf32>
    %137 = math.log %136 : vector<8x1xf32>
    %138 = arith.addf %131, %137 : vector<8x1xf32>
    %cst_57 = arith.constant dense<0.000000e+00> : vector<8xf32>
    %139 = vector.multi_reduction <add>, %129, %cst_57 [1] : vector<8x16xf32> to vector<8xf32>
    %140 = vector.shape_cast %139 : vector<8xf32> to vector<8x1xf32>
    %cst_58 = arith.constant 0.000000e+00 : f32
    %141 = vector.broadcast %cst_58 : f32 to vector<8x16xf32>
    %142 = arith.select %96, %129, %141 : vector<8x16xi1>, vector<8x16xf32>
    %cst_59 = arith.constant dense<0.000000e+00> : vector<8xf32>
    %143 = vector.multi_reduction <add>, %142, %cst_59 [1] : vector<8x16xf32> to vector<8xf32>
    %144 = vector.shape_cast %143 : vector<8xf32> to vector<8x1xf32>
    %145 = arith.subf %138, %144 : vector<8x1xf32>
    %cst_60 = arith.constant 0.899999976 : f32
    %146 = vector.broadcast %cst_60 : f32 to vector<8x1xf32>
    %147 = arith.mulf %146, %145 : vector<8x1xf32>
    %cst_61 = arith.constant 1.600000e+01 : f32
    %148 = vector.broadcast %cst_61 : f32 to vector<8x1xf32>
    %149 = arith.mulf %148, %138 : vector<8x1xf32>
    %150 = arith.subf %149, %140 : vector<8x1xf32>
    %cst_62 = arith.constant 6.250000e-03 : f32
    %151 = vector.broadcast %cst_62 : f32 to vector<8x1xf32>
    %152 = arith.mulf %151, %150 : vector<8x1xf32>
    %153 = arith.addf %147, %152 : vector<8x1xf32>
    %154 = vector.shape_cast %153 : vector<8x1xf32> to vector<1x8x1xf32>
    %cst_63 = arith.constant dense<0.000000e+00> : vector<1xf32>
    %155 = vector.multi_reduction <add>, %154, %cst_63 [1, 2] : vector<1x8x1xf32> to vector<1xf32>
    %156 = vector.shape_cast %155 : vector<1xf32> to vector<1x1x1xf32>
    %157 = vector.extract %156[0, 0, 0] : f32 from vector<1x1x1xf32>
    %cst_64 = arith.constant 1.250000e-01 : f32
    %158 = arith.mulf %157, %cst_64 : f32
    %cst_65 = arith.constant 5.000000e-01 : f32
    %159 = arith.mulf %cst_65, %158 : f32
    %160 = arith.addf %128, %159 : f32
    %161 = tpu.iota {dimensions = array<i32: 1>} : vector<1x128xi32>
    %c0_i32 = arith.constant 0 : i32
    %162 = vector.broadcast %c0_i32 : i32 to vector<1x128xi32>
    %163 = arith.cmpi eq, %161, %162 : vector<1x128xi32>
    %cst_66 = arith.constant 0.000000e+00 : f32
    %164 = vector.broadcast %92 : f32 to vector<1x128xf32>
    %165 = vector.broadcast %cst_66 : f32 to vector<1x128xf32>
    %166 = arith.select %163, %164, %165 : vector<1x128xi1>, vector<1x128xf32>
    %c1_i32 = arith.constant 1 : i32
    %167 = vector.broadcast %c1_i32 : i32 to vector<1x128xi32>
    %168 = arith.cmpi eq, %161, %167 : vector<1x128xi32>
    %cst_67 = arith.constant 0.000000e+00 : f32
    %169 = vector.broadcast %160 : f32 to vector<1x128xf32>
    %170 = vector.broadcast %cst_67 : f32 to vector<1x128xf32>
    %171 = arith.select %168, %169, %170 : vector<1x128xi1>, vector<1x128xf32>
    %172 = arith.addf %166, %171 : vector<1x128xf32>
    %c0_68 = arith.constant 0 : index
    %c0_69 = arith.constant 0 : index
    %173 = vector.load %arg9[%c0_68, %c0_69] : memref<1x128xf32, #tpu.memory_space<vmem>>, vector<1x128xf32>
    tpu.vector_store %arg9[%c0_68, %c0_69], %172 {strides = array<i32>} : memref<1x128xf32, #tpu.memory_space<vmem>>, vector<1x128xf32>,
    return
  }
}

</mosaic_0001>

<llo_original>
// kernel: _lambda_.1
$region0: #{_lambda_.1}
  #allocation0 [shape = 'u32[]', space=smem, size = 0x4, offset = 0x4, fixed_abs, tag = 'smem constant byte address 0x4 - core index']
  #allocation1 [shape = 'u32[144,128]{1,0:T(1,128)}', space=vmem, size = 0x12000, scoped, tag = 'internal scratch']
  #allocation2 [shape = 'f32[1,1]{1,0:T(1,128)S(6)}', space=smem, size = 0x200, scoped, tag = 'scoped memory for _lambda_.1']
  %s0 = inlined_call_operand.vmem [shape: f32[8,32], index: 0, kind: input, shape index: {}]
  %s1 = inlined_call_operand.vmem [shape: f32[8,32], index: 1, kind: input, shape index: {}]
  %s2 = inlined_call_operand.vmem [shape: f32[8,32], index: 2, kind: input, shape index: {}]
  %s3 = inlined_call_operand.vmem [shape: f32[8,32], index: 3, kind: input, shape index: {}]
  %s4 = inlined_call_operand.vmem [shape: f32[8,16], index: 4, kind: input, shape index: {}]
  %s5 = inlined_call_operand.vmem [shape: f32[8,16], index: 5, kind: input, shape index: {}]
  %s6 = inlined_call_operand.vmem [shape: s32[8,1], index: 6, kind: input, shape index: {}]
  %s7 = inlined_call_operand.<no memory space> [shape: f32[1,1], index: 7, kind: input, shape index: {}]
  %s8 = inlined_call_operand.hbm [shape: f32[8,8], index: 8, kind: output, shape index: {0}]
  %s9 = inlined_call_operand.vmem [shape: f32[1,128], index: 9, kind: output, shape index: {1}]
  %10 = xla_tuple %s8, %s9
  %s11 = sld [smem:[#allocation0]]
  $region50: #{_lambda_.1} parent=0
    _
  %s13 = ssub.s32 1, %s11
  %s14 = scalar_select 0, %s13, %s11
  %15 = sst [smem:[#allocation2]] %s7
  $region1: #{_lambda_.1} parent=0
    #allocation3 [shape = 'u8[4096]{0}', space=vmem, size = 0x1000, scoped, tag = 'output window, operand 0, single buffered']
    #allocation4 [shape = 's32[1]{0}', space=sflag, size = 0x4, scoped, tag = 'scoped memory for _lambda_.1']
    %16 = vsyncpa [#allocation4], 0
    // Predicated region
    $region2: #{_lambda_.1} parent=1 // pred_check
      _
    $region3: #{_lambda_.1} parent=1 // pred_check_branch
      %18 = sbr.rel (0) target = $region5
    $region4: #{_lambda_.1} parent=1 // pred_region
      _
    $region5: #{_lambda_.1} parent=1 // pred_fallthru
      _
    // Predicated region
    $region6: #{_lambda_.1} parent=1 // pred_check
      _
    $region7: #{_lambda_.1} parent=1 // pred_check_branch
      %20 = sbr.rel (0) target = $region9
    $region8: #{_lambda_.1} parent=1 // pred_region
      _
    $region9: #{_lambda_.1} parent=1 // pred_fallthru
      _
    // Predicated region
    $region10: #{_lambda_.1} parent=1 // pred_check
      _
    $region11: #{_lambda_.1} parent=1 // pred_check_branch
      %22 = sbr.rel (0) target = $region13
    $region12: #{_lambda_.1} parent=1 // pred_region
      _
    $region13: #{_lambda_.1} parent=1 // pred_fallthru
      _
    // Predicated region
    $region14: #{_lambda_.1} parent=1 // pred_check
      _
    $region15: #{_lambda_.1} parent=1 // pred_check_branch
      %24 = sbr.rel (0) target = $region17
    $region16: #{_lambda_.1} parent=1 // pred_region
      _
    $region17: #{_lambda_.1} parent=1 // pred_fallthru
      _
    // Predicated region
    $region18: #{_lambda_.1} parent=1 // pred_check
      _
    $region19: #{_lambda_.1} parent=1 // pred_check_branch
      %26 = sbr.rel (0) target = $region21
    $region20: #{_lambda_.1} parent=1 // pred_region
      _
    $region21: #{_lambda_.1} parent=1 // pred_fallthru
      _
    // Predicated region
    $region22: #{_lambda_.1} parent=1 // pred_check
      _
    $region23: #{_lambda_.1} parent=1 // pred_check_branch
      %28 = sbr.rel (0) target = $region25
    $region24: #{_lambda_.1} parent=1 // pred_region
      _
    $region25: #{_lambda_.1} parent=1 // pred_fallthru
      _
    // Predicated region
    $region26: #{_lambda_.1} parent=1 // pred_check
      _
    $region27: #{_lambda_.1} parent=1 // pred_check_branch
      %30 = sbr.rel (0) target = $region29
    $region28: #{_lambda_.1} parent=1 // pred_region
      _
    $region29: #{_lambda_.1} parent=1 // pred_fallthru
      _
    // Predicated region
    $region30: #{_lambda_.1} parent=1 // pred_check
      _
    $region31: #{_lambda_.1} parent=1 // pred_check_branch
      %32 = sbr.rel (0) target = $region33
    $region32: #{_lambda_.1} parent=1 // pred_region
      _
    $region33: #{_lambda_.1} parent=1 // pred_fallthru
      _
    %s33 = sld [smem:[#allocation2]]
    %v34 = vlaneseq
    %v35 = vshrl.u32 %v34, 7
    %v36 = vlaneseq
    %v37 = vand.u32 %v36, 127
    %vm38 = vcmp.eq.s32.totalorder %v35, %v37
    %v39 = vld [vmem:[%s0] sm:$0xff]
    %v40 = vld [vmem:[%s2] sm:$0xff]
    %vm41 = vcmask 261120
    %v43 = vsel %vm41, %v39, 0
    %v46 = vsel %vm41, %v40, 0
    %48 = vmatprep.subr.mxu0 0.0
    %49 = vmatpush1.xpose.msra.mxu0 %v46
    %50 = vmatprep.subr.mxu0 0.0
    %51 = vmatpush1.xpose.msra.mxu0 0.0
    %52 = vmatprep.subr.mxu0 0.0
    %53 = vmatpush1.xpose.msra.mxu0 0.0
    %54 = vmatprep.subr.mxu0 0.0
    %55 = vmatpush1.xpose.msra.mxu0 0.0
    %56 = vmatprep.subr.mxu0 0.0
    %57 = vmatpush1.xpose.msra.mxu0 0.0
    %58 = vmatprep.subr.mxu0 0.0
    %59 = vmatpush1.xpose.msra.mxu0 0.0
    %60 = vmatprep.subr.mxu0 0.0
    %61 = vmatpush1.xpose.msra.mxu0 0.0
    %62 = vmatprep.subr.mxu0 0.0
    %63 = vmatpush1.xpose.msra.mxu0 0.0
    %64 = vmatprep.subr.mxu0 0.0
    %65 = vmatpush1.xpose.msra.mxu0 0.0
    %66 = vmatprep.subr.mxu0 0.0
    %67 = vmatpush1.xpose.msra.mxu0 0.0
    %68 = vmatprep.subr.mxu0 0.0
    %69 = vmatpush1.xpose.msra.mxu0 0.0
    %70 = vmatprep.subr.mxu0 0.0
    %71 = vmatpush1.xpose.msra.mxu0 0.0
    %72 = vmatprep.subr.mxu0 0.0
    %73 = vmatpush1.xpose.msra.mxu0 0.0
    %74 = vmatprep.subr.mxu0 0.0
    %75 = vmatpush1.xpose.msra.mxu0 0.0
    %76 = vmatprep.subr.mxu0 0.0
    %77 = vmatpush1.xpose.msra.mxu0 0.0
    %78 = vmatprep.subr.mxu0 0.0
    %79 = vmatpush1.xpose.msra.mxu0 0.0
    %80 = vmatprep.subr.mxu0 0.0
    %81 = vmatpush1.xpose.msra.mxu0 0.0
    %82 = vmatprep.subr.mxu0 0.0
    %83 = vmatpush1.xpose.msra.mxu0 0.0
    %84 = vmatprep.subr.mxu0 0.0
    %85 = vmatpush1.xpose.msra.mxu0 0.0
    %86 = vmatprep.subr.mxu0 0.0
    %87 = vmatpush1.xpose.msra.mxu0 0.0
    %88 = vmatprep.subr.mxu0 0.0
    %89 = vmatpush1.xpose.msra.mxu0 0.0
    %90 = vmatprep.subr.mxu0 0.0
    %91 = vmatpush1.xpose.msra.mxu0 0.0
    %92 = vmatprep.subr.mxu0 0.0
    %93 = vmatpush1.xpose.msra.mxu0 0.0
    %94 = vmatprep.subr.mxu0 0.0
    %95 = vmatpush1.xpose.msra.mxu0 0.0
    %96 = vmatprep.subr.mxu0 0.0
    %97 = vmatpush1.xpose.msra.mxu0 0.0
    %98 = vmatprep.subr.mxu0 0.0
    %99 = vmatpush1.xpose.msra.mxu0 0.0
    %100 = vmatprep.subr.mxu0 0.0
    %101 = vmatpush1.xpose.msra.mxu0 0.0
    %102 = vmatprep.subr.mxu0 0.0
    %103 = vmatpush1.xpose.msra.mxu0 0.0
    %104 = vmatprep.subr.mxu0 0.0
    %105 = vmatpush1.xpose.msra.mxu0 0.0
    %106 = vmatprep.subr.mxu0 0.0
    %107 = vmatpush1.xpose.msra.mxu0 0.0
    %108 = vmatprep.subr.mxu0 0.0
    %109 = vmatpush1.xpose.msra.mxu0 0.0
    %110 = vmatprep.subr.mxu0 0.0
    %111 = vmatpush1.xpose.msra.mxu0 0.0
    %112 = vmatprep.mubr.f32.mxu0 0.0
    %113 = vmatmul.mubr.f32.gmra.mrb[0].mxu0 %v43
    %v114 = vpop.f32.mrb[0].mxu0
    %v115 = vadd.f32 0.0, %v114
    %v116 = vpop.f32.mrb[0].mxu0
    %117 = vdwg.mxu0
    %v118 = vstv %s33
    %v119 = vmul.f32 %v118, %v115
    %v120 = vsel %vm38, %v119, 0.0
    %vm121 = vcmask 64512
    %v122 = vsel %vm121, %v120, 0.0
    %123 = vadd.xlane.f32.xlu0 %v122
    %v124 = vpop.xlane.xlu0 %123
    %v125 = vrot.slane %v122, 4
    %v126 = vadd.f32 %v122, %v125
    %v127 = vrot.slane %v126, 2
    %v128 = vadd.f32 %v126, %v127
    %v129 = vrot.slane %v128, 1
    %v130 = vadd.f32 %v128, %v129
    %v131 = vsel %vm121, %v119, -inf
    %132 = vmax.xlane.f32.xlu0 %v131
    %v133 = vpop.xlane.xlu0 %132
    %v134 = vsub.f32 %v119, %v133
    %v135 = vmul.f32 %v134, 1.442695
    %v136 = vpow.pop %v135
    %v137 = vsel %vm121, %v136, 0.0
    %138 = vadd.xlane.f32.xlu0 %v137
    %v139 = vpop.xlane.xlu0 %138
    %v140 = vlog2.pop %v139
    %v141 = vmul.f32 %v140, 0.6931472
    %v142 = vadd.f32 %v133, %v141
    %v143 = vrot.slane %v131, 4
    %v144 = vmax.f32 %v131, %v143
    %v145 = vrot.slane %v144, 2
    %v146 = vmax.f32 %v144, %v145
    %v147 = vrot.slane %v146, 1
    %v148 = vmax.f32 %v146, %v147
    %v149 = vsub.f32 %v119, %v148
    %v150 = vmul.f32 %v149, 1.442695
    %v151 = vpow.pop %v150
    %v152 = vsel %vm121, %v151, 0.0
    %v153 = vrot.slane %v152, 4
    %v154 = vadd.f32 %v152, %v153
    %v155 = vrot.slane %v154, 2
    %v156 = vadd.f32 %v154, %v155
    %v157 = vrot.slane %v156, 1
    %v158 = vadd.f32 %v156, %v157
    %v159 = vlog2.pop %v158
    %v160 = vmul.f32 %v159, 0.6931472
    %v161 = vadd.f32 %v148, %v160
    %v162 = vsub.f32 %v142, %v124
    %vm163 = vcmask 7168
    %v164 = vsel %vm163, %v162, 0.0
    %165 = vadd.xlane.f32.xlu0 %v164
    %v166 = vpop.xlane.xlu0 %165
    %v167 = vrot.slane %v166, 4
    %v168 = vadd.f32 %v166, %v167
    %v169 = vrot.slane %v168, 2
    %v170 = vadd.f32 %v168, %v169
    %v171 = vrot.slane %v170, 1
    %v172 = vadd.f32 %v170, %v171
    %s173 = vtos %v172
    %s174 = smul.f32 %s173, 0.125
    %v175 = vsub.f32 %v161, %v130
    %vm176 = vcmask 57344
    %v177 = vsel %vm176, %v175, 0.0
    %178 = vadd.xlane.f32.xlu0 %v177
    %v179 = vpop.xlane.xlu0 %178
    %v180 = vrot.slane %v179, 4
    %v181 = vadd.f32 %v179, %v180
    %v182 = vrot.slane %v181, 2
    %v183 = vadd.f32 %v181, %v182
    %v184 = vrot.slane %v183, 1
    %v185 = vadd.f32 %v183, %v184
    %s186 = vtos %v185
    %s187 = smul.f32 %s186, 0.125
    %s188 = sadd.f32 %s174, %s187
    %s189 = smul.f32 %s188, 0.5
    %s190 = sadd.f32 %s189, 0.0
    %v191 = vld [vmem:[%s1] sm:$0xff]
    %v192 = vld [vmem:[%s3] sm:$0xff]
    %v194 = vsel %vm41, %v191, 0
    %v197 = vsel %vm41, %v192, 0
    %199 = vmatprep.subr.mxu0 0.0
    %200 = vmatpush1.xpose.msra.mxu0 %v197
    %201 = vmatprep.subr.mxu0 0.0
    %202 = vmatpush1.xpose.msra.mxu0 0.0
    %203 = vmatprep.subr.mxu0 0.0
    %204 = vmatpush1.xpose.msra.mxu0 0.0
    %205 = vmatprep.subr.mxu0 0.0
    %206 = vmatpush1.xpose.msra.mxu0 0.0
    %207 = vmatprep.subr.mxu0 0.0
    %208 = vmatpush1.xpose.msra.mxu0 0.0
    %209 = vmatprep.subr.mxu0 0.0
    %210 = vmatpush1.xpose.msra.mxu0 0.0
    %211 = vmatprep.subr.mxu0 0.0
    %212 = vmatpush1.xpose.msra.mxu0 0.0
    %213 = vmatprep.subr.mxu0 0.0
    %214 = vmatpush1.xpose.msra.mxu0 0.0
    %215 = vmatprep.subr.mxu0 0.0
    %216 = vmatpush1.xpose.msra.mxu0 0.0
    %217 = vmatprep.subr.mxu0 0.0
    %218 = vmatpush1.xpose.msra.mxu0 0.0
    %219 = vmatprep.subr.mxu0 0.0
    %220 = vmatpush1.xpose.msra.mxu0 0.0
    %221 = vmatprep.subr.mxu0 0.0
    %222 = vmatpush1.xpose.msra.mxu0 0.0
    %223 = vmatprep.subr.mxu0 0.0
    %224 = vmatpush1.xpose.msra.mxu0 0.0
    %225 = vmatprep.subr.mxu0 0.0
    %226 = vmatpush1.xpose.msra.mxu0 0.0
    %227 = vmatprep.subr.mxu0 0.0
    %228 = vmatpush1.xpose.msra.mxu0 0.0
    %229 = vmatprep.subr.mxu0 0.0
    %230 = vmatpush1.xpose.msra.mxu0 0.0
    %231 = vmatprep.subr.mxu0 0.0
    %232 = vmatpush1.xpose.msra.mxu0 0.0
    %233 = vmatprep.subr.mxu0 0.0
    %234 = vmatpush1.xpose.msra.mxu0 0.0
    %235 = vmatprep.subr.mxu0 0.0
    %236 = vmatpush1.xpose.msra.mxu0 0.0
    %237 = vmatprep.subr.mxu0 0.0
    %238 = vmatpush1.xpose.msra.mxu0 0.0
    %239 = vmatprep.subr.mxu0 0.0
    %240 = vmatpush1.xpose.msra.mxu0 0.0
    %241 = vmatprep.subr.mxu0 0.0
    %242 = vmatpush1.xpose.msra.mxu0 0.0
    %243 = vmatprep.subr.mxu0 0.0
    %244 = vmatpush1.xpose.msra.mxu0 0.0
    %245 = vmatprep.subr.mxu0 0.0
    %246 = vmatpush1.xpose.msra.mxu0 0.0
    %247 = vmatprep.subr.mxu0 0.0
    %248 = vmatpush1.xpose.msra.mxu0 0.0
    %249 = vmatprep.subr.mxu0 0.0
    %250 = vmatpush1.xpose.msra.mxu0 0.0
    %251 = vmatprep.subr.mxu0 0.0
    %252 = vmatpush1.xpose.msra.mxu0 0.0
    %253 = vmatprep.subr.mxu0 0.0
    %254 = vmatpush1.xpose.msra.mxu0 0.0
    %255 = vmatprep.subr.mxu0 0.0
    %256 = vmatpush1.xpose.msra.mxu0 0.0
    %257 = vmatprep.subr.mxu0 0.0
    %258 = vmatpush1.xpose.msra.mxu0 0.0
    %259 = vmatprep.subr.mxu0 0.0
    %260 = vmatpush1.xpose.msra.mxu0 0.0
    %261 = vmatprep.subr.mxu0 0.0
    %262 = vmatpush1.xpose.msra.mxu0 0.0
    %263 = vmatprep.mubr.f32.mxu0 0.0
    %264 = vmatmul.mubr.f32.gmra.mrb[0].mxu0 %v194
    %v265 = vpop.f32.mrb[0].mxu0
    %v266 = vadd.f32 0.0, %v265
    %v267 = vpop.f32.mrb[0].mxu0
    %268 = vdwg.mxu0
    %v269 = vmul.f32 %v118, %v266
    %270 = vst.msk [vmem:[#allocation3] sm:$0xff] %vm121, %v269
    %v271 = vsel %vm38, %v269, 0.0
    %v272 = vsel %vm121, %v271, 0.0
    %273 = vadd.xlane.f32.xlu0 %v272
    %v274 = vpop.xlane.xlu0 %273
    %v275 = vrot.slane %v272, 4
    %v276 = vadd.f32 %v272, %v275
    %v277 = vrot.slane %v276, 2
    %v278 = vadd.f32 %v276, %v277
    %v279 = vrot.slane %v278, 1
    %v280 = vadd.f32 %v278, %v279
    %v281 = vsel %vm121, %v269, -inf
    %282 = vmax.xlane.f32.xlu0 %v281
    %v283 = vpop.xlane.xlu0 %282
    %v284 = vsub.f32 %v269, %v283
    %v285 = vmul.f32 %v284, 1.442695
    %v286 = vpow.pop %v285
    %v287 = vsel %vm121, %v286, 0.0
    %288 = vadd.xlane.f32.xlu0 %v287
    %v289 = vpop.xlane.xlu0 %288
    %v290 = vlog2.pop %v289
    %v291 = vmul.f32 %v290, 0.6931472
    %v292 = vadd.f32 %v283, %v291
    %v293 = vrot.slane %v281, 4
    %v294 = vmax.f32 %v281, %v293
    %v295 = vrot.slane %v294, 2
    %v296 = vmax.f32 %v294, %v295
    %v297 = vrot.slane %v296, 1
    %v298 = vmax.f32 %v296, %v297
    %v299 = vsub.f32 %v269, %v298
    %v300 = vmul.f32 %v299, 1.442695
    %v301 = vpow.pop %v300
    %v302 = vsel %vm121, %v301, 0.0
    %v303 = vrot.slane %v302, 4
    %v304 = vadd.f32 %v302, %v303
    %v305 = vrot.slane %v304, 2
    %v306 = vadd.f32 %v304, %v305
    %v307 = vrot.slane %v306, 1
    %v308 = vadd.f32 %v306, %v307
    %v309 = vlog2.pop %v308
    %v310 = vmul.f32 %v309, 0.6931472
    %v311 = vadd.f32 %v298, %v310
    %v312 = vsub.f32 %v292, %v274
    %v313 = vsel %vm163, %v312, 0.0
    %314 = vadd.xlane.f32.xlu0 %v313
    %v315 = vpop.xlane.xlu0 %314
    %v316 = vrot.slane %v315, 4
    %v317 = vadd.f32 %v315, %v316
    %v318 = vrot.slane %v317, 2
    %v319 = vadd.f32 %v317, %v318
    %v320 = vrot.slane %v319, 1
    %v321 = vadd.f32 %v319, %v320
    %s322 = vtos %v321
    %s323 = smul.f32 %s322, 0.125
    %v324 = vsub.f32 %v311, %v280
    %v325 = vsel %vm176, %v324, 0.0
    %326 = vadd.xlane.f32.xlu0 %v325
    %v327 = vpop.xlane.xlu0 %326
    %v328 = vrot.slane %v327, 4
    %v329 = vadd.f32 %v327, %v328
    %v330 = vrot.slane %v329, 2
    %v331 = vadd.f32 %v329, %v330
    %v332 = vrot.slane %v331, 1
    %v333 = vadd.f32 %v331, %v332
    %s334 = vtos %v333
    %s335 = smul.f32 %s334, 0.125
    %s336 = sadd.f32 %s323, %s335
    %s337 = smul.f32 %s336, 0.5
    %s338 = sadd.f32 %s190, %s337
    %v339 = vld [vmem:[%s6] sm:$0xff]
    %340 = vset.pattern.permute.xlu0 0
    %341 = vperm.xlu0 %340, %v339
    %v342 = vpop.permute.xlu0 %341
    %vm343 = vcmp.eq.s32.totalorder %v37, %v342
    %v344 = vld [vmem:[%s4] sm:$0xff]
    %vm345 = vcmask 130048
    %v346 = vsel %vm345, %v344, -inf
    %347 = vmax.xlane.f32.xlu0 %v346
    %v348 = vpop.xlane.xlu0 %347
    %v349 = vsub.f32 %v344, %v348
    %v350 = vmul.f32 %v349, 1.442695
    %v351 = vpow.pop %v350
    %v352 = vsel %vm345, %v351, 0.0
    %353 = vadd.xlane.f32.xlu0 %v352
    %v354 = vpop.xlane.xlu0 %353
    %v355 = vlog2.pop %v354
    %v356 = vmul.f32 %v355, 0.6931472
    %v357 = vadd.f32 %v348, %v356
    %v358 = vsel %vm345, %v344, 0.0
    %359 = vadd.xlane.f32.xlu0 %v358
    %v360 = vpop.xlane.xlu0 %359
    %v361 = vsel %vm343, %v344, 0.0
    %v362 = vsel %vm345, %v361, 0.0
    %363 = vadd.xlane.f32.xlu0 %v362
    %v364 = vpop.xlane.xlu0 %363
    %v365 = vsub.f32 %v357, %v364
    %v366 = vmul.f32 %v365, 0.9
    %v367 = vmul.f32 %v357, 16.0
    %v368 = vsub.f32 %v367, %v360
    %v369 = vmul.f32 %v368, 0.00625
    %v370 = vadd.f32 %v366, %v369
    %v371 = vsel %vm163, %v370, 0.0
    %372 = vadd.xlane.f32.xlu0 %v371
    %v373 = vpop.xlane.xlu0 %372
    %v374 = vrot.slane %v373, 4
    %v375 = vadd.f32 %v373, %v374
    %v376 = vrot.slane %v375, 2
    %v377 = vadd.f32 %v375, %v376
    %v378 = vrot.slane %v377, 1
    %v379 = vadd.f32 %v377, %v378
    %s380 = vtos %v379
    %s381 = smul.f32 %s380, 0.125
    %s382 = smul.f32 %s381, 0.5
    %s383 = sadd.f32 %s382, 0.0
    %v384 = vld [vmem:[%s5] sm:$0xff]
    %v385 = vsel %vm345, %v384, -inf
    %386 = vmax.xlane.f32.xlu0 %v385
    %v387 = vpop.xlane.xlu0 %386
    %v388 = vsub.f32 %v384, %v387
    %v389 = vmul.f32 %v388, 1.442695
    %v390 = vpow.pop %v389
    %v391 = vsel %vm345, %v390, 0.0
    %392 = vadd.xlane.f32.xlu0 %v391
    %v393 = vpop.xlane.xlu0 %392
    %v394 = vlog2.pop %v393
    %v395 = vmul.f32 %v394, 0.6931472
    %v396 = vadd.f32 %v387, %v395
    %v397 = vsel %vm345, %v384, 0.0
    %398 = vadd.xlane.f32.xlu0 %v397
    %v399 = vpop.xlane.xlu0 %398
    %v400 = vsel %vm343, %v384, 0.0
    %v401 = vsel %vm345, %v400, 0.0
    %402 = vadd.xlane.f32.xlu0 %v401
    %v403 = vpop.xlane.xlu0 %402
    %v404 = vsub.f32 %v396, %v403
    %v405 = vmul.f32 %v404, 0.9
    %v406 = vmul.f32 %v396, 16.0
    %v407 = vsub.f32 %v406, %v399
    %v408 = vmul.f32 %v407, 0.00625
    %v409 = vadd.f32 %v405, %v408
    %v410 = vsel %vm163, %v409, 0.0
    %411 = vadd.xlane.f32.xlu0 %v410
    %v412 = vpop.xlane.xlu0 %411
    %v413 = vrot.slane %v412, 4
    %v414 = vadd.f32 %v412, %v413
    %v415 = vrot.slane %v414, 2
    %v416 = vadd.f32 %v414, %v415
    %v417 = vrot.slane %v416, 1
    %v418 = vadd.f32 %v416, %v417
    %s419 = vtos %v418
    %s420 = smul.f32 %s419, 0.125
    %s421 = smul.f32 %s420, 0.5
    %s422 = sadd.f32 %s383, %s421
    %vm423 = vcmp.eq.s32.totalorder %v37, 0
    %v424 = vstv %s338
    %v425 = vsel %vm423, %v424, 0.0
    %vm426 = vcmp.eq.s32.totalorder %v37, 1
    %v427 = vstv %s422
    %v428 = vsel %vm426, %v427, 0.0
    %v429 = vadd.f32 %v425, %v428
    %430 = vst [vmem:[%s9] sm:$0x1] %v429
    // Predicated region
    $region34: #{_lambda_.1} parent=1 // pred_check
      _
    $region35: #{_lambda_.1} parent=1 // pred_check_branch
      %432 = sbr.rel (0) target = $region37
    $region36: #{_lambda_.1} parent=1 // pred_region
      %s434 = ssub.s32 128, 128
      %435 = vsyncadd [#allocation4], %s434
      %s437 = sshll.u32 [#allocation3], 4
      %s438 = int_to_ptr.vmem [resolvable:$true] %s437
      %440 = dma.vmem_to_hbm [thread:$0]  %s438, 128, %s8, [#allocation4]
    $region37: #{_lambda_.1} parent=1 // pred_fallthru
      _
    // Predicated region
    $region38: #{_lambda_.1} parent=1 // pred_check
      _
    $region39: #{_lambda_.1} parent=1 // pred_check_branch
      %442 = sbr.rel (0) target = $region41
    $region40: #{_lambda_.1} parent=1 // pred_region
      _
    $region41: #{_lambda_.1} parent=1 // pred_fallthru
      _
    // Predicated region
    $region42: #{_lambda_.1} parent=1 // pred_check
      _
    $region43: #{_lambda_.1} parent=1 // pred_check_branch
      %444 = sbr.rel (0) target = $region45
    $region44: #{_lambda_.1} parent=1 // pred_region
      %445 = dma.done [#allocation4], 128
    $region45: #{_lambda_.1} parent=1 // pred_fallthru
      _
    // Predicated region
    $region46: #{_lambda_.1} parent=1 // pred_check
      _
    $region47: #{_lambda_.1} parent=1 // pred_check_branch
      %447 = sbr.rel (0) target = $region49
    $region48: #{_lambda_.1} parent=1 // pred_region
      _
    $region49: #{_lambda_.1} parent=1 // pred_fallthru
      _
    %448 = vsyncpa [#allocation4], 1

</llo_original>
